<compile_context>
chip_gen: v7x
topology: tpu7x:2x2x1
jax: 0.10.0
libtpu: 0.0.40
codegen_flags: <defaults>
</compile_context>

<pallas_src>
import functools

import jax
import jax.numpy as jnp
from jax.experimental import pallas as pl
from jax.experimental.pallas import tpu as pltpu


# ------------------------------ Pallas kernel ------------------------------ #
def _fused_gcn_kernel(slab_ref, x_ref, o_ref, *, n, hidden):
    # Unpack the single packed input slab with static slices (no extra DMAs).
    a = slab_ref[0:n, 0:n]                    # [N, N] normalized adjacency f32
    w1 = slab_ref[n:n + 1, 0:hidden]          # [1, H]
    b1 = slab_ref[n + 1:n + 2, 0:hidden]      # [1, H]
    w2 = slab_ref[n + 2:n + 3, 0:hidden]      # [1, H]  (= W2.T)
    b2 = slab_ref[n + 3:n + 4, 0:1]           # [1, 1]
    x_row = x_ref[...]                        # [1, N]  node features as a row

    # ---- layer 1: conv1 = (A_hat @ x) @ W1 + b1  (F_in == 1)
    # A_hat @ x on the VPU/XLU (broadcast-mul + lane reduce); the W1 transform
    # is an outer product.  No [N,N]@[N,1] MXU matmul wasting 127/128 lanes.
    ax = jnp.sum(a * x_row, axis=-1, keepdims=True)          # [N, 1] f32
    h = jnp.maximum(ax * w1 + b1, 0.0)                        # [N, H] bias+ReLU
    # F.dropout(training=False) == identity (eval mode)

    # ---- layer 2: conv2 = (A_hat @ h) @ W2 + b2
    # One well-shaped MXU matmul [N,N]@[N,H]; the final [H,1] projection is a
    # VPU broadcast-mul + lane reduce (no zero-padded 128-column matmul).
    ah = jnp.dot(a, h, preferred_element_type=jnp.float32)    # [N, H] f32
    o_ref[...] = jnp.sum(ah * w2, axis=-1, keepdims=True) + b2  # [N, 1] f32


# ------------------------------- JAX wrapper ------------------------------- #
def _cost_estimate(n, hidden):
    flops = 2 * (n * n                # A_hat @ x      (VPU mul + reduce)
                 + n * hidden         # outer product with W1
                 + n * n * hidden     # A_hat @ h      (MXU)
                 + n * hidden)        # (A_hat h) @ W2 (VPU mul + reduce)
    cols = max(n, hidden)
    bytes_accessed = 4 * ((n + 4) * cols + n + n)   # slab + x_row + out
    return pl.CostEstimate(flops=flops, transcendentals=0,
                           bytes_accessed=bytes_accessed)


def fused_gcn_forward(slab, x_row, *, num_nodes, hidden):
    """Whole Net forward: one pallas_call, two input DMAs, logical [N,1] out."""
    kernel = functools.partial(_fused_gcn_kernel, n=num_nodes, hidden=hidden)
    return pl.pallas_call(
        kernel,
        out_shape=jax.ShapeDtypeStruct((num_nodes, 1), jnp.float32),
        in_specs=[
            pl.BlockSpec(memory_space=pltpu.VMEM),  # packed slab [N+4, C] f32
            pl.BlockSpec(memory_space=pltpu.VMEM),  # x as a row  [1, N]   f32
        ],
        out_specs=pl.BlockSpec(memory_space=pltpu.VMEM),
        cost_estimate=_cost_estimate(num_nodes, hidden),
    )(slab, x_row)


@functools.partial(jax.jit, static_argnames=("num_nodes", "hidden"))
def net_forward(slab, x_row, *, num_nodes, hidden):
    # The pallas_call IS the whole jitted computation: no surrounding casts,
    # reshapes, pads or slices.
    return fused_gcn_forward(slab, x_row, num_nodes=num_nodes, hidden=hidden)


# ------------------------------ graph / params ----------------------------- #
def normalized_adjacency(edge_index, num_nodes):
    """Dense D^{-1/2}(A+I)D^{-1/2} (gcn_norm with self loops), built once."""
    src, dst = edge_index[0], edge_index[1]
    adj = jnp.zeros((num_nodes, num_nodes), jnp.float32)
    adj = adj.at[dst, src].add(1.0)                 # row = dst, col = src
    eye = jnp.eye(num_nodes, dtype=jnp.float32)
    adj = adj * (1.0 - eye) + eye                   # weight-1 self loops
    deg = jnp.sum(adj, axis=1)
    d_inv_sqrt = jnp.where(deg > 0, jax.lax.rsqrt(deg), 0.0)
    return d_inv_sqrt[:, None] * adj * d_inv_sqrt[None, :]


def glorot(key, shape):
    fan_in, fan_out = shape
    limit = jnp.sqrt(6.0 / (fan_in + fan_out))
    return jax.random.uniform(key, shape, jnp.float32, -limit, limit)


def init_net_params(key, hidden_size):
    k1, k2 = jax.random.split(key)
    return {
        "w1": glorot(k1, (1, hidden_size)),
        "b1": jnp.zeros((1, hidden_size), jnp.float32),
        "w2": glorot(k2, (hidden_size, 1)),
        "b2": jnp.zeros((1, 1), jnp.float32),
    }


def pack_graph_and_params(a_hat, params):
    """One-time prep: pack A_hat + all weights/biases into ONE f32 slab so the
    kernel needs a single parameter DMA.  Layout (rows):
        [0:N]   cols [0:N] : A_hat
        [N]     cols [0:H] : w1
        [N+1]   cols [0:H] : b1
        [N+2]   cols [0:H] : w2.T
        [N+3]   col  0     : b2
    """
    n = a_hat.shape[0]
    hidden = params["w1"].shape[1]
    cols = max(n, hidden)
    slab = jnp.zeros((n + 4, cols), jnp.float32)
    slab = slab.at[0:n, 0:n].set(a_hat.astype(jnp.float32))
    slab = slab.at[n, 0:hidden].set(params["w1"][0])
    slab = slab.at[n + 1, 0:hidden].set(params["b1"][0])
    slab = slab.at[n + 2, 0:hidden].set(params["w2"][:, 0])
    slab = slab.at[n + 3, 0].set(params["b2"][0, 0])
    return slab


def net_reference(x, a_hat, params):
    """Pure-JAX reference of Net.forward (eval mode), f32."""
    h = a_hat @ (x @ params["w1"]) + params["b1"]
    h = jnp.maximum(h, 0.0)
    return a_hat @ (h @ params["w2"]) + params["b2"]


# ---------------------------------- main ----------------------------------- #
if __name__ == "__main__":
    hidden_size = 32
    num_nodes = 8

    key = jax.random.PRNGKey(0)
    k_param, k_x = jax.random.split(key)

    params = init_net_params(k_param, hidden_size)

    # node features: logical [N, 1]; kept as a lane-major row [1, N] (one-time,
    # outside the forward path) so the kernel needs no in-kernel transpose.
    x = jax.random.normal(k_x, (num_nodes, 1), jnp.float32)
    x_row = x.reshape(1, num_nodes)

    # simple bidirectional ring graph: [2, 2N] edge_index
    src = jnp.arange(num_nodes, dtype=jnp.int32)
    dst = (src + 1) % num_nodes
    edge_index = jnp.stack(
        [jnp.concatenate([src, dst]), jnp.concatenate([dst, src])], axis=0
    )

    # adjacency normalization + packing done ONCE per graph/params (hoisted
    # out of the forward path).
    a_hat = normalized_adjacency(edge_index, num_nodes)
    slab = pack_graph_and_params(a_hat, params)

    out = net_forward(slab, x_row, num_nodes=num_nodes, hidden=hidden_size)
    jax.block_until_ready(out)
    assert out.shape == (num_nodes, 1)

    ref = net_reference(x, a_hat, params)
    assert jnp.allclose(out, ref, rtol=1e-4, atol=1e-5)

    print("KERNEL_OK")
</pallas_src>

<mosaic_0001>
module attributes {stable_mosaic.version = 11 : i64} {
  func.func @_fused_gcn_kernel(%arg0: memref<12x32xf32, #tpu.memory_space<vmem>>, %arg1: memref<1x8xf32, #tpu.memory_space<vmem>>, %arg2: memref<8x1xf32, #tpu.memory_space<vmem>>) attributes {dimension_semantics = [], scalar_prefetch = 0 : i64, scratch_operands = 0 : i64, tpu.core_type = #tpu.core_type<tc>} {
    %c0 = arith.constant 0 : index
    %c0_0 = arith.constant 0 : index
    %0 = vector.load %arg0[%c0, %c0_0] : memref<12x32xf32, #tpu.memory_space<vmem>>, vector<8x8xf32>
    %c8 = arith.constant 8 : index
    %c0_1 = arith.constant 0 : index
    %1 = vector.load %arg0[%c8, %c0_1] : memref<12x32xf32, #tpu.memory_space<vmem>>, vector<1x32xf32>
    %c9 = arith.constant 9 : index
    %c0_2 = arith.constant 0 : index
    %2 = vector.load %arg0[%c9, %c0_2] : memref<12x32xf32, #tpu.memory_space<vmem>>, vector<1x32xf32>
    %c10 = arith.constant 10 : index
    %c0_3 = arith.constant 0 : index
    %3 = vector.load %arg0[%c10, %c0_3] : memref<12x32xf32, #tpu.memory_space<vmem>>, vector<1x32xf32>
    %c11 = arith.constant 11 : index
    %c0_4 = arith.constant 0 : index
    %4 = vector.load %arg0[%c11, %c0_4] : memref<12x32xf32, #tpu.memory_space<vmem>>, vector<1x1xf32>
    %c0_5 = arith.constant 0 : index
    %c0_6 = arith.constant 0 : index
    %5 = vector.load %arg1[%c0_5, %c0_6] : memref<1x8xf32, #tpu.memory_space<vmem>>, vector<1x8xf32>
    %6 = vector.broadcast %5 : vector<1x8xf32> to vector<8x8xf32>
    %7 = arith.mulf %0, %6 : vector<8x8xf32>
    %cst = arith.constant dense<0.000000e+00> : vector<8xf32>
    %8 = vector.multi_reduction <add>, %7, %cst [1] : vector<8x8xf32> to vector<8xf32>
    %9 = vector.shape_cast %8 : vector<8xf32> to vector<8x1xf32>
    %10 = vector.broadcast %9 : vector<8x1xf32> to vector<8x32xf32>
    %11 = vector.broadcast %1 : vector<1x32xf32> to vector<8x32xf32>
    %12 = arith.mulf %10, %11 : vector<8x32xf32>
    %13 = vector.broadcast %2 : vector<1x32xf32> to vector<8x32xf32>
    %14 = arith.addf %12, %13 : vector<8x32xf32>
    %cst_7 = arith.constant 0.000000e+00 : f32
    %15 = vector.broadcast %cst_7 : f32 to vector<8x32xf32>
    %16 = arith.maximumf %14, %15 : vector<8x32xf32>
    %cst_8 = arith.constant dense<0.000000e+00> : vector<8x32xf32>
    %17 = tpu.matmul %0, %16, %cst_8 {dimension_numbers = #tpu.dot_dimension_numbers<[1], [0], [0], [1], [0, 0, 1, 1], [], []>} : vector<8x8xf32>, vector<8x32xf32>, vector<8x32xf32> -> vector<8x32xf32>
    %18 = vector.broadcast %3 : vector<1x32xf32> to vector<8x32xf32>
    %19 = arith.mulf %17, %18 : vector<8x32xf32>
    %cst_9 = arith.constant dense<0.000000e+00> : vector<8xf32>
    %20 = vector.multi_reduction <add>, %19, %cst_9 [1] : vector<8x32xf32> to vector<8xf32>
    %21 = vector.shape_cast %20 : vector<8xf32> to vector<8x1xf32>
    %22 = vector.broadcast %4 : vector<1x1xf32> to vector<8x1xf32>
    %23 = arith.addf %21, %22 : vector<8x1xf32>
    %c0_10 = arith.constant 0 : index
    %c0_11 = arith.constant 0 : index
    %24 = vector.load %arg2[%c0_10, %c0_11] : memref<8x1xf32, #tpu.memory_space<vmem>>, vector<8x1xf32>
    tpu.vector_store %arg2[%c0_10, %c0_11], %23 {strides = array<i32>} : memref<8x1xf32, #tpu.memory_space<vmem>>, vector<8x1xf32>,
    return
  }
}

</mosaic_0001>

<llo_original>
// kernel: net_forward.1
$region0: #{net_forward.1}
  #allocation0 [shape = 'u32[]', space=smem, size = 0x4, offset = 0x4, fixed_abs, tag = 'smem constant byte address 0x4 - core index']
  #allocation1 [shape = 'u32[144,128]{1,0:T(1,128)}', space=vmem, size = 0x12000, scoped, tag = 'internal scratch']
  %s0 = inlined_call_operand.hbm [shape: f32[12,32], index: 0, kind: input, shape index: {}]
  %s1 = inlined_call_operand.vmem [shape: f32[1,8], index: 1, kind: input, shape index: {}]
  %s2 = inlined_call_operand.vmem [shape: f32[8,1], index: 2, kind: output, shape index: {}]
  %s3 = sld [smem:[#allocation0]]
  $region22: #{net_forward.1} parent=0
    _
  %s5 = ssub.s32 1, %s3
  %s6 = scalar_select 0, %s5, %s3
  $region1: #{net_forward.1} parent=0
    #allocation2 [shape = 'u8[8192]{0}', space=vmem, size = 0x2000, scoped, tag = 'input window, operand 0, single buffered']
    #allocation3 [shape = 's32[1]{0}', space=sflag, size = 0x4, scoped, tag = 'scoped memory for net_forward.1']
    %7 = vsyncpa [#allocation3], 0
    // Predicated region
    $region2: #{net_forward.1} parent=1 // pred_check
      _
    $region3: #{net_forward.1} parent=1 // pred_check_branch
      %9 = sbr.rel (0) target = $region5
    $region4: #{net_forward.1} parent=1 // pred_region
      %s11 = ssub.s32 256, 256
      %12 = vsyncadd [#allocation3], %s11
      %s13 = sshll.u32 [#allocation2], 4
      %s14 = int_to_ptr.vmem [resolvable:$true] %s13
      %19 = dma.hbm_to_vmem [thread:$0]  %s0, 256, %s14, [#allocation3], 128, 128, 8
    $region5: #{net_forward.1} parent=1 // pred_fallthru
      _
    // Predicated region
    $region6: #{net_forward.1} parent=1 // pred_check
      _
    $region7: #{net_forward.1} parent=1 // pred_check_branch
      %21 = sbr.rel (0) target = $region9
    $region8: #{net_forward.1} parent=1 // pred_region
      _
    $region9: #{net_forward.1} parent=1 // pred_fallthru
      _
    // Predicated region
    $region10: #{net_forward.1} parent=1 // pred_check
      _
    $region11: #{net_forward.1} parent=1 // pred_check_branch
      %23 = sbr.rel (0) target = $region13
    $region12: #{net_forward.1} parent=1 // pred_region
      %24 = dma.done [#allocation3], 256
    $region13: #{net_forward.1} parent=1 // pred_fallthru
      _
    %v25 = vld [vmem:[#allocation2] sm:$0xff]
    %v26 = vld [vmem:[#allocation2 + $0x8] sm:$0x1]
    %v27 = vld [vmem:[#allocation2 + $0x9] sm:$0x1]
    %v28 = vld [vmem:[#allocation2 + $0xa] sm:$0x1]
    %v29 = vld [vmem:[#allocation2 + $0xb] sm:$0x1]
    %v30 = vld [vmem:[%s1] sm:$0x1]
    %v32 = vlaneseq
    %v33 = vshrl.u32 %v32, 7
    %v34 = vsub.s32 0, %v33
    %v35 = vrot.slane %v30, %v34
    %v37 = vmul.f32 %v25, %v35
    %vm38 = vcmask 64512
    %v39 = vsel %vm38, %v37, 0.0
    %40 = vadd.xlane.f32.xlu0 %v39
    %v41 = vpop.xlane.xlu0 %40
    %v42 = vlaneseq
    %v43 = vshrl.u32 %v42, 7
    %v44 = vsub.s32 0, %v43
    %v45 = vrot.slane %v26, %v44
    %v46 = vmul.f32 %v41, %v45
    %v47 = vlaneseq
    %v48 = vshrl.u32 %v47, 7
    %v49 = vsub.s32 0, %v48
    %v50 = vrot.slane %v27, %v49
    %v51 = vadd.f32 %v46, %v50
    %v52 = vmax.f32 %v51, 0.0
    %v54 = vsel %vm38, %v25, 0
    %56 = vmatprep.subr.mxu0 0.0
    %57 = vmatpush1.msra.mxu0 %v52
    %58 = vmatprep.subr.mxu0 0.0
    %59 = vmatpush1.msra.mxu0 0.0
    %60 = vmatprep.subr.mxu0 0.0
    %61 = vmatpush1.msra.mxu0 0.0
    %62 = vmatprep.subr.mxu0 0.0
    %63 = vmatpush1.msra.mxu0 0.0
    %64 = vmatprep.subr.mxu0 0.0
    %65 = vmatpush1.msra.mxu0 0.0
    %66 = vmatprep.subr.mxu0 0.0
    %67 = vmatpush1.msra.mxu0 0.0
    %68 = vmatprep.subr.mxu0 0.0
    %69 = vmatpush1.msra.mxu0 0.0
    %70 = vmatprep.subr.mxu0 0.0
    %71 = vmatpush1.msra.mxu0 0.0
    %72 = vmatprep.subr.mxu0 0.0
    %73 = vmatpush1.msra.mxu0 0.0
    %74 = vmatprep.subr.mxu0 0.0
    %75 = vmatpush1.msra.mxu0 0.0
    %76 = vmatprep.subr.mxu0 0.0
    %77 = vmatpush1.msra.mxu0 0.0
    %78 = vmatprep.subr.mxu0 0.0
    %79 = vmatpush1.msra.mxu0 0.0
    %80 = vmatprep.subr.mxu0 0.0
    %81 = vmatpush1.msra.mxu0 0.0
    %82 = vmatprep.subr.mxu0 0.0
    %83 = vmatpush1.msra.mxu0 0.0
    %84 = vmatprep.subr.mxu0 0.0
    %85 = vmatpush1.msra.mxu0 0.0
    %86 = vmatprep.subr.mxu0 0.0
    %87 = vmatpush1.msra.mxu0 0.0
    %88 = vmatprep.subr.mxu0 0.0
    %89 = vmatpush1.msra.mxu0 0.0
    %90 = vmatprep.subr.mxu0 0.0
    %91 = vmatpush1.msra.mxu0 0.0
    %92 = vmatprep.subr.mxu0 0.0
    %93 = vmatpush1.msra.mxu0 0.0
    %94 = vmatprep.subr.mxu0 0.0
    %95 = vmatpush1.msra.mxu0 0.0
    %96 = vmatprep.subr.mxu0 0.0
    %97 = vmatpush1.msra.mxu0 0.0
    %98 = vmatprep.subr.mxu0 0.0
    %99 = vmatpush1.msra.mxu0 0.0
    %100 = vmatprep.subr.mxu0 0.0
    %101 = vmatpush1.msra.mxu0 0.0
    %102 = vmatprep.subr.mxu0 0.0
    %103 = vmatpush1.msra.mxu0 0.0
    %104 = vmatprep.subr.mxu0 0.0
    %105 = vmatpush1.msra.mxu0 0.0
    %106 = vmatprep.subr.mxu0 0.0
    %107 = vmatpush1.msra.mxu0 0.0
    %108 = vmatprep.subr.mxu0 0.0
    %109 = vmatpush1.msra.mxu0 0.0
    %110 = vmatprep.subr.mxu0 0.0
    %111 = vmatpush1.msra.mxu0 0.0
    %112 = vmatprep.subr.mxu0 0.0
    %113 = vmatpush1.msra.mxu0 0.0
    %114 = vmatprep.subr.mxu0 0.0
    %115 = vmatpush1.msra.mxu0 0.0
    %116 = vmatprep.subr.mxu0 0.0
    %117 = vmatpush1.msra.mxu0 0.0
    %118 = vmatprep.subr.mxu0 0.0
    %119 = vmatpush1.msra.mxu0 0.0
    %120 = vmatprep.mubr.f32.mxu0 0.0
    %121 = vmatmul.mubr.f32.gmra.mrb[0].mxu0 %v54
    %v122 = vpop.f32.mrb[0].mxu0
    %v123 = vadd.f32 0.0, %v122
    %v124 = vpop.f32.mrb[0].mxu0
    %125 = vdwg.mxu0
    %v126 = vlaneseq
    %v127 = vshrl.u32 %v126, 7
    %v128 = vsub.s32 0, %v127
    %v129 = vrot.slane %v28, %v128
    %v130 = vmul.f32 %v123, %v129
    %vm131 = vcmask 261120
    %v132 = vsel %vm131, %v130, 0.0
    %133 = vadd.xlane.f32.xlu0 %v132
    %v134 = vpop.xlane.xlu0 %133
    %v135 = vlaneseq
    %v136 = vshrl.u32 %v135, 7
    %v137 = vsub.s32 0, %v136
    %v138 = vrot.slane %v29, %v137
    %v139 = vadd.f32 %v134, %v138
    %vm140 = vcmask 7168
    %141 = vst.msk [vmem:[%s2] sm:$0xff] %vm140, %v139
    // Predicated region
    $region14: #{net_forward.1} parent=1 // pred_check
      _
    $region15: #{net_forward.1} parent=1 // pred_check_branch
      %143 = sbr.rel (0) target = $region17
    $region16: #{net_forward.1} parent=1 // pred_region
      _
    $region17: #{net_forward.1} parent=1 // pred_fallthru
      _
    // Predicated region
    $region18: #{net_forward.1} parent=1 // pred_check
      _
    $region19: #{net_forward.1} parent=1 // pred_check_branch
      %145 = sbr.rel (0) target = $region21
    $region20: #{net_forward.1} parent=1 // pred_region
      _
    $region21: #{net_forward.1} parent=1 // pred_fallthru
      _
    %146 = vsyncpa [#allocation3], 1

</llo_original>
